<compile_context>
chip_gen: v7x
topology: tpu7x:2x2x1
jax: 0.10.0
libtpu: 0.0.40
codegen_flags: <defaults>
</compile_context>

<pallas_src>
import functools

import jax
import jax.numpy as jnp
from jax import lax
from jax.experimental import pallas as pl
from jax.experimental.pallas import tpu as pltpu


def _sigmoid(z):
    # tanh-form sigmoid: the transcendental runs on the EUP, no VALU divide.
    return 0.5 * (jnp.tanh(0.5 * z) + 1.0)


def _round_up(x, m):
    return ((x + m - 1) // m) * m


def _mlp_kernel(x_ref,
                w1_ref, b1_ref, w2_ref, b2_ref, w3_ref, b3_ref,
                w4_ref, b4_ref, w5_ref, b5_ref,
                o_ref, *, matmul_dtype):
    # x_ref: (tb, n_in) native layout.  Weights are torch-native (out, in),
    # biases (out, 1).  All intermediate activations are (features, tb) so the
    # batch sits on the 128-lane axis.
    x = x_ref[...]

    def first_layer(w_ref, b_ref):
        # Contract W dim 1 (in) with x dim 1 (features) -> (n_h, tb).
        return lax.dot_general(
            w_ref[...].astype(matmul_dtype), x.astype(matmul_dtype),
            (((1,), (1,)), ((), ())),
            preferred_element_type=jnp.float32) + b_ref[...]

    def layer(h, w_ref, b_ref):
        # (out, in) @ (in, tb) -> (out, tb), f32 accumulation on the MXU.
        return jnp.dot(w_ref[...].astype(matmul_dtype), h.astype(matmul_dtype),
                       preferred_element_type=jnp.float32) + b_ref[...]

    h = _sigmoid(first_layer(w1_ref, b1_ref))
    h = _sigmoid(layer(h, w2_ref, b2_ref))
    h = _sigmoid(layer(h, w3_ref, b3_ref))
    h = _sigmoid(layer(h, w4_ref, b4_ref))
    o_ref[...] = layer(h, w5_ref, b5_ref).astype(o_ref.dtype)   # no final act


def mlp_forward(x, params, *, batch_tile=2048, bf16_matmul=False):
    """x: (B, n_in) f32.  params: list of (W (out,in), b (out,1)) torch-native."""
    B, n_in = x.shape
    n_h = params[0][0].shape[0]
    n_out = params[-1][0].shape[0]

    # Tile selection:
    #  * small B: one exact block (tb == B) -> no padding, no wasted columns.
    #  * large B: >= 2 lane-aligned tiles so both v7x TensorCores get work,
    #    capped at batch_tile; ragged last tile handled by Pallas masking
    #    (batch columns are independent, so garbage rows never contaminate
    #    valid output columns).
    if B <= 256:
        tb = B
    else:
        tb = min(batch_tile, max(128, _round_up(pl.cdiv(B, 2), 128)))
    grid = (pl.cdiv(B, tb),)

    flat = [x]
    in_specs = [pl.BlockSpec((tb, n_in), lambda i: (i, 0))]
    for (w, b) in params:
        flat += [w, b]
        # Constant block index -> weights/biases stay VMEM-resident across
        # all batch-tile grid steps.
        in_specs += [pl.BlockSpec(w.shape, lambda i: (0, 0)),
                     pl.BlockSpec(b.shape, lambda i: (0, 0))]

    flops = 2 * B * (n_in * n_h + 3 * n_h * n_h + n_h * n_out)
    bytes_accessed = 4 * (x.size
                          + sum(w.size + b.size for (w, b) in params)
                          + n_out * B)
    cost = pl.CostEstimate(flops=flops,
                           transcendentals=4 * B * n_h,
                           bytes_accessed=bytes_accessed)

    kernel = functools.partial(
        _mlp_kernel,
        matmul_dtype=jnp.bfloat16 if bf16_matmul else jnp.float32)

    y_t = pl.pallas_call(
        kernel,
        out_shape=jax.ShapeDtypeStruct((n_out, B), jnp.float32),
        grid_spec=pltpu.PrefetchScalarGridSpec(
            num_scalar_prefetch=0,
            grid=grid,
            in_specs=in_specs,
            out_specs=pl.BlockSpec((n_out, tb), lambda i: (0, i)),
        ),
        compiler_params=pltpu.CompilerParams(
            dimension_semantics=("parallel",),   # batch tiles shard over TCs
        ),
        cost_estimate=cost,
    )(*flat)

    return y_t.T                                 # (B, n_out)


def init_params(key, n_input, n_hidden, n_output):
    """Mirror torch.nn.Linear default init; weights stay torch-native (out, in)."""
    sizes = [(n_hidden, n_input), (n_hidden, n_hidden), (n_hidden, n_hidden),
             (n_hidden, n_hidden), (n_output, n_hidden)]
    params = []
    for (fan_out, fan_in) in sizes:
        key, kw, kb = jax.random.split(key, 3)
        bound = 1.0 / float(fan_in) ** 0.5
        w = jax.random.uniform(kw, (fan_out, fan_in), jnp.float32, -bound, bound)
        b = jax.random.uniform(kb, (fan_out, 1), jnp.float32, -bound, bound)
        params.append((w, b))
    return params


def reference_forward(x, params):
    # Canonical PyTorch semantics: y = x @ W.T + b, Sigmoid = 1/(1+exp(-z)).
    h = x
    for i, (w, b) in enumerate(params):
        h = h @ w.T + b.T
        if i < len(params) - 1:
            h = jax.nn.sigmoid(h)
    return h


if __name__ == "__main__":
    key = jax.random.PRNGKey(0)
    B, n_input, n_hidden, n_output = 8, 16, 32, 4

    key, kx = jax.random.split(key)
    x = jax.random.normal(kx, (B, n_input), jnp.float32)
    params = init_params(key, n_input, n_hidden, n_output)

    y = mlp_forward(x, params)
    y = jax.block_until_ready(y)

    y_ref = reference_forward(x, params)
    assert y.shape == (B, n_output)
    assert jnp.allclose(y, y_ref, atol=1e-5, rtol=1e-5)
    print("KERNEL_OK")
</pallas_src>

<mosaic_0001>
module attributes {stable_mosaic.version = 11 : i64} {
  func.func @_mlp_kernel(%arg0: i32, %arg1: memref<8x16xf32, #tpu.memory_space<vmem>>, %arg2: memref<32x16xf32, #tpu.memory_space<vmem>>, %arg3: memref<32x1xf32, #tpu.memory_space<vmem>>, %arg4: memref<32x32xf32, #tpu.memory_space<vmem>>, %arg5: memref<32x1xf32, #tpu.memory_space<vmem>>, %arg6: memref<32x32xf32, #tpu.memory_space<vmem>>, %arg7: memref<32x1xf32, #tpu.memory_space<vmem>>, %arg8: memref<32x32xf32, #tpu.memory_space<vmem>>, %arg9: memref<32x1xf32, #tpu.memory_space<vmem>>, %arg10: memref<4x32xf32, #tpu.memory_space<vmem>>, %arg11: memref<4x1xf32, #tpu.memory_space<vmem>>, %arg12: memref<4x8xf32, #tpu.memory_space<vmem>>) attributes {dimension_semantics = [#tpu.dimension_semantics<parallel>], iteration_bounds = array<i64: 1>, scalar_prefetch = 0 : i64, scratch_operands = 0 : i64, tpu.core_type = #tpu.core_type<tc>, window_params = [{transform_indices = @transform_0, window_bounds = array<i64: 8, 16>}, {pipeline_mode = #tpu.pipeline_mode<synchronous>, transform_indices = @transform_1, window_bounds = array<i64: 32, 16>}, {pipeline_mode = #tpu.pipeline_mode<synchronous>, transform_indices = @transform_2, window_bounds = array<i64: 32, 1>}, {pipeline_mode = #tpu.pipeline_mode<synchronous>, transform_indices = @transform_3, window_bounds = array<i64: 32, 32>}, {pipeline_mode = #tpu.pipeline_mode<synchronous>, transform_indices = @transform_4, window_bounds = array<i64: 32, 1>}, {pipeline_mode = #tpu.pipeline_mode<synchronous>, transform_indices = @transform_5, window_bounds = array<i64: 32, 32>}, {pipeline_mode = #tpu.pipeline_mode<synchronous>, transform_indices = @transform_6, window_bounds = array<i64: 32, 1>}, {pipeline_mode = #tpu.pipeline_mode<synchronous>, transform_indices = @transform_7, window_bounds = array<i64: 32, 32>}, {pipeline_mode = #tpu.pipeline_mode<synchronous>, transform_indices = @transform_8, window_bounds = array<i64: 32, 1>}, {pipeline_mode = #tpu.pipeline_mode<synchronous>, transform_indices = @transform_9, window_bounds = array<i64: 4, 32>}, {pipeline_mode = #tpu.pipeline_mode<synchronous>, transform_indices = @transform_10, window_bounds = array<i64: 4, 1>}, {transform_indices = @transform_11, window_bounds = array<i64: 4, 8>}]} {
    %c0 = arith.constant 0 : index
    %c0_0 = arith.constant 0 : index
    %0 = vector.load %arg1[%c0, %c0_0] : memref<8x16xf32, #tpu.memory_space<vmem>>, vector<8x16xf32>
    %c0_1 = arith.constant 0 : index
    %c0_2 = arith.constant 0 : index
    %1 = vector.load %arg2[%c0_1, %c0_2] : memref<32x16xf32, #tpu.memory_space<vmem>>, vector<32x16xf32>
    %cst = arith.constant dense<0.000000e+00> : vector<32x8xf32>
    %2 = tpu.matmul %1, %0, %cst {dimension_numbers = #tpu.dot_dimension_numbers<[1], [1], [0], [0], [0, 0, 1, 0], [], []>} : vector<32x16xf32>, vector<8x16xf32>, vector<32x8xf32> -> vector<32x8xf32>
    %c0_3 = arith.constant 0 : index
    %c0_4 = arith.constant 0 : index
    %3 = vector.load %arg3[%c0_3, %c0_4] : memref<32x1xf32, #tpu.memory_space<vmem>>, vector<32x1xf32>
    %4 = vector.broadcast %3 : vector<32x1xf32> to vector<32x8xf32>
    %5 = arith.addf %2, %4 : vector<32x8xf32>
    %cst_5 = arith.constant 5.000000e-01 : f32
    %6 = vector.broadcast %cst_5 : f32 to vector<32x8xf32>
    %7 = arith.mulf %6, %5 : vector<32x8xf32>
    %8 = math.tanh %7 : vector<32x8xf32>
    %cst_6 = arith.constant 1.000000e+00 : f32
    %9 = vector.broadcast %cst_6 : f32 to vector<32x8xf32>
    %10 = arith.addf %8, %9 : vector<32x8xf32>
    %cst_7 = arith.constant 5.000000e-01 : f32
    %11 = vector.broadcast %cst_7 : f32 to vector<32x8xf32>
    %12 = arith.mulf %11, %10 : vector<32x8xf32>
    %c0_8 = arith.constant 0 : index
    %c0_9 = arith.constant 0 : index
    %13 = vector.load %arg4[%c0_8, %c0_9] : memref<32x32xf32, #tpu.memory_space<vmem>>, vector<32x32xf32>
    %cst_10 = arith.constant dense<0.000000e+00> : vector<32x8xf32>
    %14 = tpu.matmul %13, %12, %cst_10 {dimension_numbers = #tpu.dot_dimension_numbers<[1], [0], [0], [1], [0, 0, 1, 1], [], []>} : vector<32x32xf32>, vector<32x8xf32>, vector<32x8xf32> -> vector<32x8xf32>
    %c0_11 = arith.constant 0 : index
    %c0_12 = arith.constant 0 : index
    %15 = vector.load %arg5[%c0_11, %c0_12] : memref<32x1xf32, #tpu.memory_space<vmem>>, vector<32x1xf32>
    %16 = vector.broadcast %15 : vector<32x1xf32> to vector<32x8xf32>
    %17 = arith.addf %14, %16 : vector<32x8xf32>
    %cst_13 = arith.constant 5.000000e-01 : f32
    %18 = vector.broadcast %cst_13 : f32 to vector<32x8xf32>
    %19 = arith.mulf %18, %17 : vector<32x8xf32>
    %20 = math.tanh %19 : vector<32x8xf32>
    %cst_14 = arith.constant 1.000000e+00 : f32
    %21 = vector.broadcast %cst_14 : f32 to vector<32x8xf32>
    %22 = arith.addf %20, %21 : vector<32x8xf32>
    %cst_15 = arith.constant 5.000000e-01 : f32
    %23 = vector.broadcast %cst_15 : f32 to vector<32x8xf32>
    %24 = arith.mulf %23, %22 : vector<32x8xf32>
    %c0_16 = arith.constant 0 : index
    %c0_17 = arith.constant 0 : index
    %25 = vector.load %arg6[%c0_16, %c0_17] : memref<32x32xf32, #tpu.memory_space<vmem>>, vector<32x32xf32>
    %cst_18 = arith.constant dense<0.000000e+00> : vector<32x8xf32>
    %26 = tpu.matmul %25, %24, %cst_18 {dimension_numbers = #tpu.dot_dimension_numbers<[1], [0], [0], [1], [0, 0, 1, 1], [], []>} : vector<32x32xf32>, vector<32x8xf32>, vector<32x8xf32> -> vector<32x8xf32>
    %c0_19 = arith.constant 0 : index
    %c0_20 = arith.constant 0 : index
    %27 = vector.load %arg7[%c0_19, %c0_20] : memref<32x1xf32, #tpu.memory_space<vmem>>, vector<32x1xf32>
    %28 = vector.broadcast %27 : vector<32x1xf32> to vector<32x8xf32>
    %29 = arith.addf %26, %28 : vector<32x8xf32>
    %cst_21 = arith.constant 5.000000e-01 : f32
    %30 = vector.broadcast %cst_21 : f32 to vector<32x8xf32>
    %31 = arith.mulf %30, %29 : vector<32x8xf32>
    %32 = math.tanh %31 : vector<32x8xf32>
    %cst_22 = arith.constant 1.000000e+00 : f32
    %33 = vector.broadcast %cst_22 : f32 to vector<32x8xf32>
    %34 = arith.addf %32, %33 : vector<32x8xf32>
    %cst_23 = arith.constant 5.000000e-01 : f32
    %35 = vector.broadcast %cst_23 : f32 to vector<32x8xf32>
    %36 = arith.mulf %35, %34 : vector<32x8xf32>
    %c0_24 = arith.constant 0 : index
    %c0_25 = arith.constant 0 : index
    %37 = vector.load %arg8[%c0_24, %c0_25] : memref<32x32xf32, #tpu.memory_space<vmem>>, vector<32x32xf32>
    %cst_26 = arith.constant dense<0.000000e+00> : vector<32x8xf32>
    %38 = tpu.matmul %37, %36, %cst_26 {dimension_numbers = #tpu.dot_dimension_numbers<[1], [0], [0], [1], [0, 0, 1, 1], [], []>} : vector<32x32xf32>, vector<32x8xf32>, vector<32x8xf32> -> vector<32x8xf32>
    %c0_27 = arith.constant 0 : index
    %c0_28 = arith.constant 0 : index
    %39 = vector.load %arg9[%c0_27, %c0_28] : memref<32x1xf32, #tpu.memory_space<vmem>>, vector<32x1xf32>
    %40 = vector.broadcast %39 : vector<32x1xf32> to vector<32x8xf32>
    %41 = arith.addf %38, %40 : vector<32x8xf32>
    %cst_29 = arith.constant 5.000000e-01 : f32
    %42 = vector.broadcast %cst_29 : f32 to vector<32x8xf32>
    %43 = arith.mulf %42, %41 : vector<32x8xf32>
    %44 = math.tanh %43 : vector<32x8xf32>
    %cst_30 = arith.constant 1.000000e+00 : f32
    %45 = vector.broadcast %cst_30 : f32 to vector<32x8xf32>
    %46 = arith.addf %44, %45 : vector<32x8xf32>
    %cst_31 = arith.constant 5.000000e-01 : f32
    %47 = vector.broadcast %cst_31 : f32 to vector<32x8xf32>
    %48 = arith.mulf %47, %46 : vector<32x8xf32>
    %c0_32 = arith.constant 0 : index
    %c0_33 = arith.constant 0 : index
    %49 = vector.load %arg10[%c0_32, %c0_33] : memref<4x32xf32, #tpu.memory_space<vmem>>, vector<4x32xf32>
    %cst_34 = arith.constant dense<0.000000e+00> : vector<4x8xf32>
    %50 = tpu.matmul %49, %48, %cst_34 {dimension_numbers = #tpu.dot_dimension_numbers<[1], [0], [0], [1], [0, 0, 1, 1], [], []>} : vector<4x32xf32>, vector<32x8xf32>, vector<4x8xf32> -> vector<4x8xf32>
    %c0_35 = arith.constant 0 : index
    %c0_36 = arith.constant 0 : index
    %51 = vector.load %arg11[%c0_35, %c0_36] : memref<4x1xf32, #tpu.memory_space<vmem>>, vector<4x1xf32>
    %52 = vector.broadcast %51 : vector<4x1xf32> to vector<4x8xf32>
    %53 = arith.addf %50, %52 : vector<4x8xf32>
    %c0_37 = arith.constant 0 : index
    %c0_38 = arith.constant 0 : index
    %54 = vector.load %arg12[%c0_37, %c0_38] : memref<4x8xf32, #tpu.memory_space<vmem>>, vector<4x8xf32>
    tpu.vector_store %arg12[%c0_37, %c0_38], %53 {strides = array<i32>} : memref<4x8xf32, #tpu.memory_space<vmem>>, vector<4x8xf32>,
    return
  }
  func.func @transform_0(%arg0: i32) -> (i32, i32) {
    %c0_i32 = arith.constant 0 : i32
    %c0_i32_0 = arith.constant 0 : i32
    return %arg0, %c0_i32 : i32, i32
  }
  func.func @transform_1(%arg0: i32) -> (i32, i32) {
    %c0_i32 = arith.constant 0 : i32
    %c0_i32_0 = arith.constant 0 : i32
    %c0_i32_1 = arith.constant 0 : i32
    return %c0_i32, %c0_i32_0 : i32, i32
  }
  func.func @transform_2(%arg0: i32) -> (i32, i32) {
    %c0_i32 = arith.constant 0 : i32
    %c0_i32_0 = arith.constant 0 : i32
    %c0_i32_1 = arith.constant 0 : i32
    return %c0_i32, %c0_i32_0 : i32, i32
  }
  func.func @transform_3(%arg0: i32) -> (i32, i32) {
    %c0_i32 = arith.constant 0 : i32
    %c0_i32_0 = arith.constant 0 : i32
    %c0_i32_1 = arith.constant 0 : i32
    return %c0_i32, %c0_i32_0 : i32, i32
  }
  func.func @transform_4(%arg0: i32) -> (i32, i32) {
    %c0_i32 = arith.constant 0 : i32
    %c0_i32_0 = arith.constant 0 : i32
    %c0_i32_1 = arith.constant 0 : i32
    return %c0_i32, %c0_i32_0 : i32, i32
  }
  func.func @transform_5(%arg0: i32) -> (i32, i32) {
    %c0_i32 = arith.constant 0 : i32
    %c0_i32_0 = arith.constant 0 : i32
    %c0_i32_1 = arith.constant 0 : i32
    return %c0_i32, %c0_i32_0 : i32, i32
  }
  func.func @transform_6(%arg0: i32) -> (i32, i32) {
    %c0_i32 = arith.constant 0 : i32
    %c0_i32_0 = arith.constant 0 : i32
    %c0_i32_1 = arith.constant 0 : i32
    return %c0_i32, %c0_i32_0 : i32, i32
  }
  func.func @transform_7(%arg0: i32) -> (i32, i32) {
    %c0_i32 = arith.constant 0 : i32
    %c0_i32_0 = arith.constant 0 : i32
    %c0_i32_1 = arith.constant 0 : i32
    return %c0_i32, %c0_i32_0 : i32, i32
  }
  func.func @transform_8(%arg0: i32) -> (i32, i32) {
    %c0_i32 = arith.constant 0 : i32
    %c0_i32_0 = arith.constant 0 : i32
    %c0_i32_1 = arith.constant 0 : i32
    return %c0_i32, %c0_i32_0 : i32, i32
  }
  func.func @transform_9(%arg0: i32) -> (i32, i32) {
    %c0_i32 = arith.constant 0 : i32
    %c0_i32_0 = arith.constant 0 : i32
    %c0_i32_1 = arith.constant 0 : i32
    return %c0_i32, %c0_i32_0 : i32, i32
  }
  func.func @transform_10(%arg0: i32) -> (i32, i32) {
    %c0_i32 = arith.constant 0 : i32
    %c0_i32_0 = arith.constant 0 : i32
    %c0_i32_1 = arith.constant 0 : i32
    return %c0_i32, %c0_i32_0 : i32, i32
  }
  func.func @transform_11(%arg0: i32) -> (i32, i32) {
    %c0_i32 = arith.constant 0 : i32
    %c0_i32_0 = arith.constant 0 : i32
    return %c0_i32, %arg0 : i32, i32
  }
}

</mosaic_0001>

<llo_original>
// kernel: tpu_custom_call.1
$region0: #{tpu_custom_call.1}
  #allocation0 [shape = 'u32[]', space=smem, size = 0x4, offset = 0x4, fixed_abs, tag = 'smem constant byte address 0x4 - core index']
  #allocation1 [shape = 'u32[144,128]{1,0:T(1,128)}', space=vmem, size = 0x12000, scoped, tag = 'internal scratch']
  %s0 = inlined_call_operand.vmem [shape: f32[8,16], index: 0, kind: input, shape index: {}]
  %s1 = inlined_call_operand.vmem [shape: f32[32,16], index: 1, kind: input, shape index: {}]
  %s2 = inlined_call_operand.vmem [shape: f32[32,1], index: 2, kind: input, shape index: {}]
  %s3 = inlined_call_operand.vmem [shape: f32[32,32], index: 3, kind: input, shape index: {}]
  %s4 = inlined_call_operand.vmem [shape: f32[32,1], index: 4, kind: input, shape index: {}]
  %s5 = inlined_call_operand.vmem [shape: f32[32,32], index: 5, kind: input, shape index: {}]
  %s6 = inlined_call_operand.vmem [shape: f32[32,1], index: 6, kind: input, shape index: {}]
  %s7 = inlined_call_operand.vmem [shape: f32[32,32], index: 7, kind: input, shape index: {}]
  %s8 = inlined_call_operand.vmem [shape: f32[32,1], index: 8, kind: input, shape index: {}]
  %s9 = inlined_call_operand.vmem [shape: f32[4,32], index: 9, kind: input, shape index: {}]
  %s10 = inlined_call_operand.vmem [shape: f32[4,1], index: 10, kind: input, shape index: {}]
  %s11 = inlined_call_operand.hbm [shape: f32[4,8], index: 11, kind: output, shape index: {}]
  %s12 = sld [smem:[#allocation0]]
  $region54: #{tpu_custom_call.1} parent=0
    _
  %s14 = ssub.s32 1, %s12
  %s15 = scalar_select 0, %s14, %s12
  $region1: #{tpu_custom_call.1} parent=0
    #allocation2 [shape = 'u8[2048]{0}', space=vmem, size = 0x800, scoped, tag = 'output window, operand 0, single buffered']
    #allocation3 [shape = 's32[1]{0}', space=sflag, size = 0x4, scoped, tag = 'scoped memory for tpu_custom_call.1']
    %16 = vsyncpa [#allocation3], 0
    // Predicated region
    $region2: #{tpu_custom_call.1} parent=1 // pred_check
      _
    $region3: #{tpu_custom_call.1} parent=1 // pred_check_branch
      %18 = sbr.rel (0) target = $region5
    $region4: #{tpu_custom_call.1} parent=1 // pred_region
      _
    $region5: #{tpu_custom_call.1} parent=1 // pred_fallthru
      _
    // Predicated region
    $region6: #{tpu_custom_call.1} parent=1 // pred_check
      _
    $region7: #{tpu_custom_call.1} parent=1 // pred_check_branch
      %20 = sbr.rel (0) target = $region9
    $region8: #{tpu_custom_call.1} parent=1 // pred_region
      _
    $region9: #{tpu_custom_call.1} parent=1 // pred_fallthru
      _
    // Predicated region
    $region10: #{tpu_custom_call.1} parent=1 // pred_check
      _
    $region11: #{tpu_custom_call.1} parent=1 // pred_check_branch
      %22 = sbr.rel (0) target = $region13
    $region12: #{tpu_custom_call.1} parent=1 // pred_region
      _
    $region13: #{tpu_custom_call.1} parent=1 // pred_fallthru
      _
    // Predicated region
    $region14: #{tpu_custom_call.1} parent=1 // pred_check
      _
    $region15: #{tpu_custom_call.1} parent=1 // pred_check_branch
      %24 = sbr.rel (0) target = $region17
    $region16: #{tpu_custom_call.1} parent=1 // pred_region
      _
    $region17: #{tpu_custom_call.1} parent=1 // pred_fallthru
      _
    // Predicated region
    $region18: #{tpu_custom_call.1} parent=1 // pred_check
      _
    $region19: #{tpu_custom_call.1} parent=1 // pred_check_branch
      %26 = sbr.rel (0) target = $region21
    $region20: #{tpu_custom_call.1} parent=1 // pred_region
      _
    $region21: #{tpu_custom_call.1} parent=1 // pred_fallthru
      _
    // Predicated region
    $region22: #{tpu_custom_call.1} parent=1 // pred_check
      _
    $region23: #{tpu_custom_call.1} parent=1 // pred_check_branch
      %28 = sbr.rel (0) target = $region25
    $region24: #{tpu_custom_call.1} parent=1 // pred_region
      _
    $region25: #{tpu_custom_call.1} parent=1 // pred_fallthru
      _
    // Predicated region
    $region26: #{tpu_custom_call.1} parent=1 // pred_check
      _
    $region27: #{tpu_custom_call.1} parent=1 // pred_check_branch
      %30 = sbr.rel (0) target = $region29
    $region28: #{tpu_custom_call.1} parent=1 // pred_region
      _
    $region29: #{tpu_custom_call.1} parent=1 // pred_fallthru
      _
    // Predicated region
    $region30: #{tpu_custom_call.1} parent=1 // pred_check
      _
    $region31: #{tpu_custom_call.1} parent=1 // pred_check_branch
      %32 = sbr.rel (0) target = $region33
    $region32: #{tpu_custom_call.1} parent=1 // pred_region
      _
    $region33: #{tpu_custom_call.1} parent=1 // pred_fallthru
      _
    // Predicated region
    $region34: #{tpu_custom_call.1} parent=1 // pred_check
      _
    $region35: #{tpu_custom_call.1} parent=1 // pred_check_branch
      %34 = sbr.rel (0) target = $region37
    $region36: #{tpu_custom_call.1} parent=1 // pred_region
      _
    $region37: #{tpu_custom_call.1} parent=1 // pred_fallthru
      _
    // Predicated region
    $region38: #{tpu_custom_call.1} parent=1 // pred_check
      _
    $region39: #{tpu_custom_call.1} parent=1 // pred_check_branch
      %36 = sbr.rel (0) target = $region41
    $region40: #{tpu_custom_call.1} parent=1 // pred_region
      _
    $region41: #{tpu_custom_call.1} parent=1 // pred_fallthru
      _
    // Predicated region
    $region42: #{tpu_custom_call.1} parent=1 // pred_check
      _
    $region43: #{tpu_custom_call.1} parent=1 // pred_check_branch
      %38 = sbr.rel (0) target = $region45
    $region44: #{tpu_custom_call.1} parent=1 // pred_region
      _
    $region45: #{tpu_custom_call.1} parent=1 // pred_fallthru
      _
    %v39 = vld [vmem:[%s0] sm:$0xff]
    %v40 = vld [vmem:[%s1] sm:$0xff]
    %v41 = vld [vmem:[%s1 + $0x8] sm:$0xff]
    %v42 = vld [vmem:[%s1 + $0x10] sm:$0xff]
    %v43 = vld [vmem:[%s1 + $0x18] sm:$0xff]
    %v44 = vld [vmem:[%s2] sm:$0xff]
    %v45 = vld [vmem:[%s2 + $0x8] sm:$0xff]
    %v46 = vld [vmem:[%s2 + $0x10] sm:$0xff]
    %v47 = vld [vmem:[%s2 + $0x18] sm:$0xff]
    %49 = vset.pattern.permute.xlu0 0
    %50 = vperm.xlu0 %49, %v44
    %v51 = vpop.permute.xlu0 %50
    %54 = vset.pattern.permute.xlu0 0
    %55 = vperm.xlu0 %54, %v45
    %v56 = vpop.permute.xlu0 %55
    %59 = vset.pattern.permute.xlu0 0
    %60 = vperm.xlu0 %59, %v46
    %v61 = vpop.permute.xlu0 %60
    %64 = vset.pattern.permute.xlu0 0
    %65 = vperm.xlu0 %64, %v47
    %v66 = vpop.permute.xlu0 %65
    %vm68 = vcmask 130048
    %v70 = vsel %vm68, %v40, 0
    %v73 = vsel %vm68, %v41, 0
    %v76 = vsel %vm68, %v42, 0
    %v79 = vsel %vm68, %v43, 0
    %v82 = vsel %vm68, %v39, 0
    %84 = vmatprep.subr.mxu0 0.0
    %85 = vmatpush1.xpose.msra.mxu0 %v82
    %86 = vmatprep.subr.mxu0 0.0
    %87 = vmatpush1.xpose.msra.mxu0 0.0
    %88 = vmatprep.subr.mxu0 0.0
    %89 = vmatpush1.xpose.msra.mxu0 0.0
    %90 = vmatprep.subr.mxu0 0.0
    %91 = vmatpush1.xpose.msra.mxu0 0.0
    %92 = vmatprep.subr.mxu0 0.0
    %93 = vmatpush1.xpose.msra.mxu0 0.0
    %94 = vmatprep.subr.mxu0 0.0
    %95 = vmatpush1.xpose.msra.mxu0 0.0
    %96 = vmatprep.subr.mxu0 0.0
    %97 = vmatpush1.xpose.msra.mxu0 0.0
    %98 = vmatprep.subr.mxu0 0.0
    %99 = vmatpush1.xpose.msra.mxu0 0.0
    %100 = vmatprep.subr.mxu0 0.0
    %101 = vmatpush1.xpose.msra.mxu0 0.0
    %102 = vmatprep.subr.mxu0 0.0
    %103 = vmatpush1.xpose.msra.mxu0 0.0
    %104 = vmatprep.subr.mxu0 0.0
    %105 = vmatpush1.xpose.msra.mxu0 0.0
    %106 = vmatprep.subr.mxu0 0.0
    %107 = vmatpush1.xpose.msra.mxu0 0.0
    %108 = vmatprep.subr.mxu0 0.0
    %109 = vmatpush1.xpose.msra.mxu0 0.0
    %110 = vmatprep.subr.mxu0 0.0
    %111 = vmatpush1.xpose.msra.mxu0 0.0
    %112 = vmatprep.subr.mxu0 0.0
    %113 = vmatpush1.xpose.msra.mxu0 0.0
    %114 = vmatprep.subr.mxu0 0.0
    %115 = vmatpush1.xpose.msra.mxu0 0.0
    %116 = vmatprep.subr.mxu0 0.0
    %117 = vmatpush1.xpose.msra.mxu0 0.0
    %118 = vmatprep.subr.mxu0 0.0
    %119 = vmatpush1.xpose.msra.mxu0 0.0
    %120 = vmatprep.subr.mxu0 0.0
    %121 = vmatpush1.xpose.msra.mxu0 0.0
    %122 = vmatprep.subr.mxu0 0.0
    %123 = vmatpush1.xpose.msra.mxu0 0.0
    %124 = vmatprep.subr.mxu0 0.0
    %125 = vmatpush1.xpose.msra.mxu0 0.0
    %126 = vmatprep.subr.mxu0 0.0
    %127 = vmatpush1.xpose.msra.mxu0 0.0
    %128 = vmatprep.subr.mxu0 0.0
    %129 = vmatpush1.xpose.msra.mxu0 0.0
    %130 = vmatprep.subr.mxu0 0.0
    %131 = vmatpush1.xpose.msra.mxu0 0.0
    %132 = vmatprep.subr.mxu0 0.0
    %133 = vmatpush1.xpose.msra.mxu0 0.0
    %134 = vmatprep.subr.mxu0 0.0
    %135 = vmatpush1.xpose.msra.mxu0 0.0
    %136 = vmatprep.subr.mxu0 0.0
    %137 = vmatpush1.xpose.msra.mxu0 0.0
    %138 = vmatprep.subr.mxu0 0.0
    %139 = vmatpush1.xpose.msra.mxu0 0.0
    %140 = vmatprep.subr.mxu0 0.0
    %141 = vmatpush1.xpose.msra.mxu0 0.0
    %142 = vmatprep.subr.mxu0 0.0
    %143 = vmatpush1.xpose.msra.mxu0 0.0
    %144 = vmatprep.subr.mxu0 0.0
    %145 = vmatpush1.xpose.msra.mxu0 0.0
    %146 = vmatprep.subr.mxu0 0.0
    %147 = vmatpush1.xpose.msra.mxu0 0.0
    %148 = vmatprep.mubr.f32.mxu0 0.0
    %149 = vmatmul.mubr.f32.gmra.mrb[0].mxu0 %v70
    %v150 = vpop.f32.mrb[0].mxu0
    %v151 = vadd.f32 %v51, %v150
    %v152 = vpop.f32.mrb[0].mxu0
    %153 = vmatprep.mubr.f32.mxu0 0.0
    %154 = vmatmul.mubr.f32.gmra.mrb[0].mxu0 %v73
    %v155 = vpop.f32.mrb[0].mxu0
    %v156 = vadd.f32 %v56, %v155
    %v157 = vpop.f32.mrb[0].mxu0
    %158 = vmatprep.mubr.f32.mxu0 0.0
    %159 = vmatmul.mubr.f32.gmra.mrb[0].mxu0 %v76
    %v160 = vpop.f32.mrb[0].mxu0
    %v161 = vadd.f32 %v61, %v160
    %v162 = vpop.f32.mrb[0].mxu0
    %163 = vmatprep.mubr.f32.mxu0 0.0
    %164 = vmatmul.mubr.f32.gmra.mrb[0].mxu0 %v79
    %v165 = vpop.f32.mrb[0].mxu0
    %v166 = vadd.f32 %v66, %v165
    %v167 = vpop.f32.mrb[0].mxu0
    %168 = vdwg.mxu0
    %v169 = vmul.f32 %v151, 0.5
    %v170 = vmul.f32 %v156, 0.5
    %v171 = vmul.f32 %v161, 0.5
    %v172 = vmul.f32 %v166, 0.5
    %v173 = vtanh.pop %v169
    %v174 = vtanh.pop %v170
    %v175 = vtanh.pop %v171
    %v176 = vtanh.pop %v172
    %v177 = vadd.f32 %v173, 1.0
    %v178 = vadd.f32 %v174, 1.0
    %v179 = vadd.f32 %v175, 1.0
    %v180 = vadd.f32 %v176, 1.0
    %v181 = vmul.f32 %v177, 0.5
    %v182 = vmul.f32 %v178, 0.5
    %v183 = vmul.f32 %v179, 0.5
    %v184 = vmul.f32 %v180, 0.5
    %v185 = vld [vmem:[%s3] sm:$0xff]
    %v186 = vld [vmem:[%s3 + $0x8] sm:$0xff]
    %v187 = vld [vmem:[%s3 + $0x10] sm:$0xff]
    %v188 = vld [vmem:[%s3 + $0x18] sm:$0xff]
    %v189 = vld [vmem:[%s4] sm:$0xff]
    %v190 = vld [vmem:[%s4 + $0x8] sm:$0xff]
    %v191 = vld [vmem:[%s4 + $0x10] sm:$0xff]
    %v192 = vld [vmem:[%s4 + $0x18] sm:$0xff]
    %194 = vset.pattern.permute.xlu0 0
    %195 = vperm.xlu0 %194, %v189
    %v196 = vpop.permute.xlu0 %195
    %199 = vset.pattern.permute.xlu0 0
    %200 = vperm.xlu0 %199, %v190
    %v201 = vpop.permute.xlu0 %200
    %204 = vset.pattern.permute.xlu0 0
    %205 = vperm.xlu0 %204, %v191
    %v206 = vpop.permute.xlu0 %205
    %209 = vset.pattern.permute.xlu0 0
    %210 = vperm.xlu0 %209, %v192
    %v211 = vpop.permute.xlu0 %210
    %vm213 = vcmask 261120
    %v215 = vsel %vm213, %v185, 0
    %v218 = vsel %vm213, %v186, 0
    %v221 = vsel %vm213, %v187, 0
    %v224 = vsel %vm213, %v188, 0
    %226 = vmatprep.subr.mxu0 0.0
    %227 = vmatpush1.msra.mxu0 %v181
    %228 = vmatprep.subr.mxu0 0.0
    %229 = vmatpush1.msra.mxu0 %v182
    %230 = vmatprep.subr.mxu0 0.0
    %231 = vmatpush1.msra.mxu0 %v183
    %232 = vmatprep.subr.mxu0 0.0
    %233 = vmatpush1.msra.mxu0 %v184
    %234 = vmatprep.subr.mxu0 0.0
    %235 = vmatpush1.msra.mxu0 0.0
    %236 = vmatprep.subr.mxu0 0.0
    %237 = vmatpush1.msra.mxu0 0.0
    %238 = vmatprep.subr.mxu0 0.0
    %239 = vmatpush1.msra.mxu0 0.0
    %240 = vmatprep.subr.mxu0 0.0
    %241 = vmatpush1.msra.mxu0 0.0
    %242 = vmatprep.subr.mxu0 0.0
    %243 = vmatpush1.msra.mxu0 0.0
    %244 = vmatprep.subr.mxu0 0.0
    %245 = vmatpush1.msra.mxu0 0.0
    %246 = vmatprep.subr.mxu0 0.0
    %247 = vmatpush1.msra.mxu0 0.0
    %248 = vmatprep.subr.mxu0 0.0
    %249 = vmatpush1.msra.mxu0 0.0
    %250 = vmatprep.subr.mxu0 0.0
    %251 = vmatpush1.msra.mxu0 0.0
    %252 = vmatprep.subr.mxu0 0.0
    %253 = vmatpush1.msra.mxu0 0.0
    %254 = vmatprep.subr.mxu0 0.0
    %255 = vmatpush1.msra.mxu0 0.0
    %256 = vmatprep.subr.mxu0 0.0
    %257 = vmatpush1.msra.mxu0 0.0
    %258 = vmatprep.subr.mxu0 0.0
    %259 = vmatpush1.msra.mxu0 0.0
    %260 = vmatprep.subr.mxu0 0.0
    %261 = vmatpush1.msra.mxu0 0.0
    %262 = vmatprep.subr.mxu0 0.0
    %263 = vmatpush1.msra.mxu0 0.0
    %264 = vmatprep.subr.mxu0 0.0
    %265 = vmatpush1.msra.mxu0 0.0
    %266 = vmatprep.subr.mxu0 0.0
    %267 = vmatpush1.msra.mxu0 0.0
    %268 = vmatprep.subr.mxu0 0.0
    %269 = vmatpush1.msra.mxu0 0.0
    %270 = vmatprep.subr.mxu0 0.0
    %271 = vmatpush1.msra.mxu0 0.0
    %272 = vmatprep.subr.mxu0 0.0
    %273 = vmatpush1.msra.mxu0 0.0
    %274 = vmatprep.subr.mxu0 0.0
    %275 = vmatpush1.msra.mxu0 0.0
    %276 = vmatprep.subr.mxu0 0.0
    %277 = vmatpush1.msra.mxu0 0.0
    %278 = vmatprep.subr.mxu0 0.0
    %279 = vmatpush1.msra.mxu0 0.0
    %280 = vmatprep.subr.mxu0 0.0
    %281 = vmatpush1.msra.mxu0 0.0
    %282 = vmatprep.subr.mxu0 0.0
    %283 = vmatpush1.msra.mxu0 0.0
    %284 = vmatprep.subr.mxu0 0.0
    %285 = vmatpush1.msra.mxu0 0.0
    %286 = vmatprep.subr.mxu0 0.0
    %287 = vmatpush1.msra.mxu0 0.0
    %288 = vmatprep.subr.mxu0 0.0
    %289 = vmatpush1.msra.mxu0 0.0
    %290 = vmatprep.mubr.f32.mxu0 0.0
    %291 = vmatmul.mubr.f32.gmra.mrb[0].mxu0 %v215
    %v292 = vpop.f32.mrb[0].mxu0
    %v293 = vadd.f32 %v196, %v292
    %v294 = vpop.f32.mrb[0].mxu0
    %295 = vmatprep.mubr.f32.mxu0 0.0
    %296 = vmatmul.mubr.f32.gmra.mrb[0].mxu0 %v218
    %v297 = vpop.f32.mrb[0].mxu0
    %v298 = vadd.f32 %v201, %v297
    %v299 = vpop.f32.mrb[0].mxu0
    %300 = vmatprep.mubr.f32.mxu0 0.0
    %301 = vmatmul.mubr.f32.gmra.mrb[0].mxu0 %v221
    %v302 = vpop.f32.mrb[0].mxu0
    %v303 = vadd.f32 %v206, %v302
    %v304 = vpop.f32.mrb[0].mxu0
    %305 = vmatprep.mubr.f32.mxu0 0.0
    %306 = vmatmul.mubr.f32.gmra.mrb[0].mxu0 %v224
    %v307 = vpop.f32.mrb[0].mxu0
    %v308 = vadd.f32 %v211, %v307
    %v309 = vpop.f32.mrb[0].mxu0
    %310 = vdwg.mxu0
    %v311 = vmul.f32 %v293, 0.5
    %v312 = vmul.f32 %v298, 0.5
    %v313 = vmul.f32 %v303, 0.5
    %v314 = vmul.f32 %v308, 0.5
    %v315 = vtanh.pop %v311
    %v316 = vtanh.pop %v312
    %v317 = vtanh.pop %v313
    %v318 = vtanh.pop %v314
    %v319 = vadd.f32 %v315, 1.0
    %v320 = vadd.f32 %v316, 1.0
    %v321 = vadd.f32 %v317, 1.0
    %v322 = vadd.f32 %v318, 1.0
    %v323 = vmul.f32 %v319, 0.5
    %v324 = vmul.f32 %v320, 0.5
    %v325 = vmul.f32 %v321, 0.5
    %v326 = vmul.f32 %v322, 0.5
    %v327 = vld [vmem:[%s5] sm:$0xff]
    %v328 = vld [vmem:[%s5 + $0x8] sm:$0xff]
    %v329 = vld [vmem:[%s5 + $0x10] sm:$0xff]
    %v330 = vld [vmem:[%s5 + $0x18] sm:$0xff]
    %v331 = vld [vmem:[%s6] sm:$0xff]
    %v332 = vld [vmem:[%s6 + $0x8] sm:$0xff]
    %v333 = vld [vmem:[%s6 + $0x10] sm:$0xff]
    %v334 = vld [vmem:[%s6 + $0x18] sm:$0xff]
    %336 = vset.pattern.permute.xlu0 0
    %337 = vperm.xlu0 %336, %v331
    %v338 = vpop.permute.xlu0 %337
    %341 = vset.pattern.permute.xlu0 0
    %342 = vperm.xlu0 %341, %v332
    %v343 = vpop.permute.xlu0 %342
    %346 = vset.pattern.permute.xlu0 0
    %347 = vperm.xlu0 %346, %v333
    %v348 = vpop.permute.xlu0 %347
    %351 = vset.pattern.permute.xlu0 0
    %352 = vperm.xlu0 %351, %v334
    %v353 = vpop.permute.xlu0 %352
    %v356 = vsel %vm213, %v327, 0
    %v359 = vsel %vm213, %v328, 0
    %v362 = vsel %vm213, %v329, 0
    %v365 = vsel %vm213, %v330, 0
    %367 = vmatprep.subr.mxu0 0.0
    %368 = vmatpush1.msra.mxu0 %v323
    %369 = vmatprep.subr.mxu0 0.0
    %370 = vmatpush1.msra.mxu0 %v324
    %371 = vmatprep.subr.mxu0 0.0
    %372 = vmatpush1.msra.mxu0 %v325
    %373 = vmatprep.subr.mxu0 0.0
    %374 = vmatpush1.msra.mxu0 %v326
    %375 = vmatprep.subr.mxu0 0.0
    %376 = vmatpush1.msra.mxu0 0.0
    %377 = vmatprep.subr.mxu0 0.0
    %378 = vmatpush1.msra.mxu0 0.0
    %379 = vmatprep.subr.mxu0 0.0
    %380 = vmatpush1.msra.mxu0 0.0
    %381 = vmatprep.subr.mxu0 0.0
    %382 = vmatpush1.msra.mxu0 0.0
    %383 = vmatprep.subr.mxu0 0.0
    %384 = vmatpush1.msra.mxu0 0.0
    %385 = vmatprep.subr.mxu0 0.0
    %386 = vmatpush1.msra.mxu0 0.0
    %387 = vmatprep.subr.mxu0 0.0
    %388 = vmatpush1.msra.mxu0 0.0
    %389 = vmatprep.subr.mxu0 0.0
    %390 = vmatpush1.msra.mxu0 0.0
    %391 = vmatprep.subr.mxu0 0.0
    %392 = vmatpush1.msra.mxu0 0.0
    %393 = vmatprep.subr.mxu0 0.0
    %394 = vmatpush1.msra.mxu0 0.0
    %395 = vmatprep.subr.mxu0 0.0
    %396 = vmatpush1.msra.mxu0 0.0
    %397 = vmatprep.subr.mxu0 0.0
    %398 = vmatpush1.msra.mxu0 0.0
    %399 = vmatprep.subr.mxu0 0.0
    %400 = vmatpush1.msra.mxu0 0.0
    %401 = vmatprep.subr.mxu0 0.0
    %402 = vmatpush1.msra.mxu0 0.0
    %403 = vmatprep.subr.mxu0 0.0
    %404 = vmatpush1.msra.mxu0 0.0
    %405 = vmatprep.subr.mxu0 0.0
    %406 = vmatpush1.msra.mxu0 0.0
    %407 = vmatprep.subr.mxu0 0.0
    %408 = vmatpush1.msra.mxu0 0.0
    %409 = vmatprep.subr.mxu0 0.0
    %410 = vmatpush1.msra.mxu0 0.0
    %411 = vmatprep.subr.mxu0 0.0
    %412 = vmatpush1.msra.mxu0 0.0
    %413 = vmatprep.subr.mxu0 0.0
    %414 = vmatpush1.msra.mxu0 0.0
    %415 = vmatprep.subr.mxu0 0.0
    %416 = vmatpush1.msra.mxu0 0.0
    %417 = vmatprep.subr.mxu0 0.0
    %418 = vmatpush1.msra.mxu0 0.0
    %419 = vmatprep.subr.mxu0 0.0
    %420 = vmatpush1.msra.mxu0 0.0
    %421 = vmatprep.subr.mxu0 0.0
    %422 = vmatpush1.msra.mxu0 0.0
    %423 = vmatprep.subr.mxu0 0.0
    %424 = vmatpush1.msra.mxu0 0.0
    %425 = vmatprep.subr.mxu0 0.0
    %426 = vmatpush1.msra.mxu0 0.0
    %427 = vmatprep.subr.mxu0 0.0
    %428 = vmatpush1.msra.mxu0 0.0
    %429 = vmatprep.subr.mxu0 0.0
    %430 = vmatpush1.msra.mxu0 0.0
    %431 = vmatprep.mubr.f32.mxu0 0.0
    %432 = vmatmul.mubr.f32.gmra.mrb[0].mxu0 %v356
    %v433 = vpop.f32.mrb[0].mxu0
    %v434 = vadd.f32 %v338, %v433
    %v435 = vpop.f32.mrb[0].mxu0
    %436 = vmatprep.mubr.f32.mxu0 0.0
    %437 = vmatmul.mubr.f32.gmra.mrb[0].mxu0 %v359
    %v438 = vpop.f32.mrb[0].mxu0
    %v439 = vadd.f32 %v343, %v438
    %v440 = vpop.f32.mrb[0].mxu0
    %441 = vmatprep.mubr.f32.mxu0 0.0
    %442 = vmatmul.mubr.f32.gmra.mrb[0].mxu0 %v362
    %v443 = vpop.f32.mrb[0].mxu0
    %v444 = vadd.f32 %v348, %v443
    %v445 = vpop.f32.mrb[0].mxu0
    %446 = vmatprep.mubr.f32.mxu0 0.0
    %447 = vmatmul.mubr.f32.gmra.mrb[0].mxu0 %v365
    %v448 = vpop.f32.mrb[0].mxu0
    %v449 = vadd.f32 %v353, %v448
    %v450 = vpop.f32.mrb[0].mxu0
    %451 = vdwg.mxu0
    %v452 = vmul.f32 %v434, 0.5
    %v453 = vmul.f32 %v439, 0.5
    %v454 = vmul.f32 %v444, 0.5
    %v455 = vmul.f32 %v449, 0.5
    %v456 = vtanh.pop %v452
    %v457 = vtanh.pop %v453
    %v458 = vtanh.pop %v454
    %v459 = vtanh.pop %v455
    %v460 = vadd.f32 %v456, 1.0
    %v461 = vadd.f32 %v457, 1.0
    %v462 = vadd.f32 %v458, 1.0
    %v463 = vadd.f32 %v459, 1.0
    %v464 = vmul.f32 %v460, 0.5
    %v465 = vmul.f32 %v461, 0.5
    %v466 = vmul.f32 %v462, 0.5
    %v467 = vmul.f32 %v463, 0.5
    %v468 = vld [vmem:[%s7] sm:$0xff]
    %v469 = vld [vmem:[%s7 + $0x8] sm:$0xff]
    %v470 = vld [vmem:[%s7 + $0x10] sm:$0xff]
    %v471 = vld [vmem:[%s7 + $0x18] sm:$0xff]
    %v472 = vld [vmem:[%s8] sm:$0xff]
    %v473 = vld [vmem:[%s8 + $0x8] sm:$0xff]
    %v474 = vld [vmem:[%s8 + $0x10] sm:$0xff]
    %v475 = vld [vmem:[%s8 + $0x18] sm:$0xff]
    %477 = vset.pattern.permute.xlu0 0
    %478 = vperm.xlu0 %477, %v472
    %v479 = vpop.permute.xlu0 %478
    %482 = vset.pattern.permute.xlu0 0
    %483 = vperm.xlu0 %482, %v473
    %v484 = vpop.permute.xlu0 %483
    %487 = vset.pattern.permute.xlu0 0
    %488 = vperm.xlu0 %487, %v474
    %v489 = vpop.permute.xlu0 %488
    %492 = vset.pattern.permute.xlu0 0
    %493 = vperm.xlu0 %492, %v475
    %v494 = vpop.permute.xlu0 %493
    %v497 = vsel %vm213, %v468, 0
    %v500 = vsel %vm213, %v469, 0
    %v503 = vsel %vm213, %v470, 0
    %v506 = vsel %vm213, %v471, 0
    %508 = vmatprep.subr.mxu0 0.0
    %509 = vmatpush1.msra.mxu0 %v464
    %510 = vmatprep.subr.mxu0 0.0
    %511 = vmatpush1.msra.mxu0 %v465
    %512 = vmatprep.subr.mxu0 0.0
    %513 = vmatpush1.msra.mxu0 %v466
    %514 = vmatprep.subr.mxu0 0.0
    %515 = vmatpush1.msra.mxu0 %v467
    %516 = vmatprep.subr.mxu0 0.0
    %517 = vmatpush1.msra.mxu0 0.0
    %518 = vmatprep.subr.mxu0 0.0
    %519 = vmatpush1.msra.mxu0 0.0
    %520 = vmatprep.subr.mxu0 0.0
    %521 = vmatpush1.msra.mxu0 0.0
    %522 = vmatprep.subr.mxu0 0.0
    %523 = vmatpush1.msra.mxu0 0.0
    %524 = vmatprep.subr.mxu0 0.0
    %525 = vmatpush1.msra.mxu0 0.0
    %526 = vmatprep.subr.mxu0 0.0
    %527 = vmatpush1.msra.mxu0 0.0
    %528 = vmatprep.subr.mxu0 0.0
    %529 = vmatpush1.msra.mxu0 0.0
    %530 = vmatprep.subr.mxu0 0.0
    %531 = vmatpush1.msra.mxu0 0.0
    %532 = vmatprep.subr.mxu0 0.0
    %533 = vmatpush1.msra.mxu0 0.0
    %534 = vmatprep.subr.mxu0 0.0
    %535 = vmatpush1.msra.mxu0 0.0
    %536 = vmatprep.subr.mxu0 0.0
    %537 = vmatpush1.msra.mxu0 0.0
    %538 = vmatprep.subr.mxu0 0.0
    %539 = vmatpush1.msra.mxu0 0.0
    %540 = vmatprep.subr.mxu0 0.0
    %541 = vmatpush1.msra.mxu0 0.0
    %542 = vmatprep.subr.mxu0 0.0
    %543 = vmatpush1.msra.mxu0 0.0
    %544 = vmatprep.subr.mxu0 0.0
    %545 = vmatpush1.msra.mxu0 0.0
    %546 = vmatprep.subr.mxu0 0.0
    %547 = vmatpush1.msra.mxu0 0.0
    %548 = vmatprep.subr.mxu0 0.0
    %549 = vmatpush1.msra.mxu0 0.0
    %550 = vmatprep.subr.mxu0 0.0
    %551 = vmatpush1.msra.mxu0 0.0
    %552 = vmatprep.subr.mxu0 0.0
    %553 = vmatpush1.msra.mxu0 0.0
    %554 = vmatprep.subr.mxu0 0.0
    %555 = vmatpush1.msra.mxu0 0.0
    %556 = vmatprep.subr.mxu0 0.0
    %557 = vmatpush1.msra.mxu0 0.0
    %558 = vmatprep.subr.mxu0 0.0
    %559 = vmatpush1.msra.mxu0 0.0
    %560 = vmatprep.subr.mxu0 0.0
    %561 = vmatpush1.msra.mxu0 0.0
    %562 = vmatprep.subr.mxu0 0.0
    %563 = vmatpush1.msra.mxu0 0.0
    %564 = vmatprep.subr.mxu0 0.0
    %565 = vmatpush1.msra.mxu0 0.0
    %566 = vmatprep.subr.mxu0 0.0
    %567 = vmatpush1.msra.mxu0 0.0
    %568 = vmatprep.subr.mxu0 0.0
    %569 = vmatpush1.msra.mxu0 0.0
    %570 = vmatprep.subr.mxu0 0.0
    %571 = vmatpush1.msra.mxu0 0.0
    %572 = vmatprep.mubr.f32.mxu0 0.0
    %573 = vmatmul.mubr.f32.gmra.mrb[0].mxu0 %v497
    %v574 = vpop.f32.mrb[0].mxu0
    %v575 = vadd.f32 %v479, %v574
    %v576 = vpop.f32.mrb[0].mxu0
    %577 = vmatprep.mubr.f32.mxu0 0.0
    %578 = vmatmul.mubr.f32.gmra.mrb[0].mxu0 %v500
    %v579 = vpop.f32.mrb[0].mxu0
    %v580 = vadd.f32 %v484, %v579
    %v581 = vpop.f32.mrb[0].mxu0
    %582 = vmatprep.mubr.f32.mxu0 0.0
    %583 = vmatmul.mubr.f32.gmra.mrb[0].mxu0 %v503
    %v584 = vpop.f32.mrb[0].mxu0
    %v585 = vadd.f32 %v489, %v584
    %v586 = vpop.f32.mrb[0].mxu0
    %587 = vmatprep.mubr.f32.mxu0 0.0
    %588 = vmatmul.mubr.f32.gmra.mrb[0].mxu0 %v506
    %v589 = vpop.f32.mrb[0].mxu0
    %v590 = vadd.f32 %v494, %v589
    %v591 = vpop.f32.mrb[0].mxu0
    %592 = vdwg.mxu0
    %v593 = vmul.f32 %v575, 0.5
    %v594 = vmul.f32 %v580, 0.5
    %v595 = vmul.f32 %v585, 0.5
    %v596 = vmul.f32 %v590, 0.5
    %v597 = vtanh.pop %v593
    %v598 = vtanh.pop %v594
    %v599 = vtanh.pop %v595
    %v600 = vtanh.pop %v596
    %v601 = vadd.f32 %v597, 1.0
    %v602 = vadd.f32 %v598, 1.0
    %v603 = vadd.f32 %v599, 1.0
    %v604 = vadd.f32 %v600, 1.0
    %v605 = vmul.f32 %v601, 0.5
    %v606 = vmul.f32 %v602, 0.5
    %v607 = vmul.f32 %v603, 0.5
    %v608 = vmul.f32 %v604, 0.5
    %v609 = vld [vmem:[%s9] sm:$0xf]
    %v610 = vld [vmem:[%s10] sm:$0xf]
    %612 = vset.pattern.permute.xlu0 0
    %613 = vperm.xlu0 %612, %v610
    %v614 = vpop.permute.xlu0 %613
    %v617 = vsel %vm213, %v609, 0
    %619 = vmatprep.subr.mxu0 0.0
    %620 = vmatpush1.msra.mxu0 %v605
    %621 = vmatprep.subr.mxu0 0.0
    %622 = vmatpush1.msra.mxu0 %v606
    %623 = vmatprep.subr.mxu0 0.0
    %624 = vmatpush1.msra.mxu0 %v607
    %625 = vmatprep.subr.mxu0 0.0
    %626 = vmatpush1.msra.mxu0 %v608
    %627 = vmatprep.subr.mxu0 0.0
    %628 = vmatpush1.msra.mxu0 0.0
    %629 = vmatprep.subr.mxu0 0.0
    %630 = vmatpush1.msra.mxu0 0.0
    %631 = vmatprep.subr.mxu0 0.0
    %632 = vmatpush1.msra.mxu0 0.0
    %633 = vmatprep.subr.mxu0 0.0
    %634 = vmatpush1.msra.mxu0 0.0
    %635 = vmatprep.subr.mxu0 0.0
    %636 = vmatpush1.msra.mxu0 0.0
    %637 = vmatprep.subr.mxu0 0.0
    %638 = vmatpush1.msra.mxu0 0.0
    %639 = vmatprep.subr.mxu0 0.0
    %640 = vmatpush1.msra.mxu0 0.0
    %641 = vmatprep.subr.mxu0 0.0
    %642 = vmatpush1.msra.mxu0 0.0
    %643 = vmatprep.subr.mxu0 0.0
    %644 = vmatpush1.msra.mxu0 0.0
    %645 = vmatprep.subr.mxu0 0.0
    %646 = vmatpush1.msra.mxu0 0.0
    %647 = vmatprep.subr.mxu0 0.0
    %648 = vmatpush1.msra.mxu0 0.0
    %649 = vmatprep.subr.mxu0 0.0
    %650 = vmatpush1.msra.mxu0 0.0
    %651 = vmatprep.subr.mxu0 0.0
    %652 = vmatpush1.msra.mxu0 0.0
    %653 = vmatprep.subr.mxu0 0.0
    %654 = vmatpush1.msra.mxu0 0.0
    %655 = vmatprep.subr.mxu0 0.0
    %656 = vmatpush1.msra.mxu0 0.0
    %657 = vmatprep.subr.mxu0 0.0
    %658 = vmatpush1.msra.mxu0 0.0
    %659 = vmatprep.subr.mxu0 0.0
    %660 = vmatpush1.msra.mxu0 0.0
    %661 = vmatprep.subr.mxu0 0.0
    %662 = vmatpush1.msra.mxu0 0.0
    %663 = vmatprep.subr.mxu0 0.0
    %664 = vmatpush1.msra.mxu0 0.0
    %665 = vmatprep.subr.mxu0 0.0
    %666 = vmatpush1.msra.mxu0 0.0
    %667 = vmatprep.subr.mxu0 0.0
    %668 = vmatpush1.msra.mxu0 0.0
    %669 = vmatprep.subr.mxu0 0.0
    %670 = vmatpush1.msra.mxu0 0.0
    %671 = vmatprep.subr.mxu0 0.0
    %672 = vmatpush1.msra.mxu0 0.0
    %673 = vmatprep.subr.mxu0 0.0
    %674 = vmatpush1.msra.mxu0 0.0
    %675 = vmatprep.subr.mxu0 0.0
    %676 = vmatpush1.msra.mxu0 0.0
    %677 = vmatprep.subr.mxu0 0.0
    %678 = vmatpush1.msra.mxu0 0.0
    %679 = vmatprep.subr.mxu0 0.0
    %680 = vmatpush1.msra.mxu0 0.0
    %681 = vmatprep.subr.mxu0 0.0
    %682 = vmatpush1.msra.mxu0 0.0
    %683 = vmatprep.mubr.f32.mxu0 0.0
    %684 = vmatmul.mubr.f32.gmra.mrb[0].mxu0 %v617
    %v685 = vpop.f32.mrb[0].mxu0
    %v686 = vadd.f32 %v614, %v685
    %v687 = vpop.f32.mrb[0].mxu0
    %688 = vdwg.mxu0
    %vm689 = vcmask 60416
    %690 = vst.msk [vmem:[#allocation2] sm:$0xf] %vm689, %v686
    // Predicated region
    $region46: #{tpu_custom_call.1} parent=1 // pred_check
      _
    $region47: #{tpu_custom_call.1} parent=1 // pred_check_branch
      %692 = sbr.rel (0) target = $region49
    $region48: #{tpu_custom_call.1} parent=1 // pred_region
      %s694 = ssub.s32 64, 64
      %695 = vsyncadd [#allocation3], %s694
      %s697 = sshll.u32 [#allocation2], 4
      %s698 = int_to_ptr.vmem [resolvable:$true] %s697
      %700 = dma.vmem_to_hbm [thread:$0]  %s698, 64, %s11, [#allocation3]
    $region49: #{tpu_custom_call.1} parent=1 // pred_fallthru
      _
    // Predicated region
    $region50: #{tpu_custom_call.1} parent=1 // pred_check
      _
    $region51: #{tpu_custom_call.1} parent=1 // pred_check_branch
      %702 = sbr.rel (0) target = $region53
    $region52: #{tpu_custom_call.1} parent=1 // pred_region
      %703 = dma.done [#allocation3], 64
    $region53: #{tpu_custom_call.1} parent=1 // pred_fallthru
      _
    %704 = vsyncpa [#allocation3], 1

</llo_original>
